<compile_context>
chip_gen: v7x
topology: tpu7x:2x2x1
jax: 0.10.0
libtpu: 0.0.40
codegen_flags: <defaults>
</compile_context>

<pallas_src>
import functools

import jax
import jax.numpy as jnp
from jax.experimental import pallas as pl
from jax.experimental.pallas import tpu as pltpu


def _round_up(x, m):
    return ((x + m - 1) // m) * m


def _vmem_capacity_bytes(default=64 << 20):
    """Physical VMEM per TensorCore; conservative default if query fails."""
    try:
        info = pltpu.get_tpu_info()
        cap = getattr(info, "vmem_capacity_bytes", None)
        if cap:
            return int(cap)
    except Exception:
        pass
    return default


def _opennet_regular_kernel(x_ref, wt_ref, b_ref, tgt_ref, loss_ref, corr_ref,
                            pooled_ref, *, n_valid, inv_hw, group_rows):
    # x_ref     : (tile_n, HW, C)   feature-map tile (bf16 or f32), channels-last
    # wt_ref    : (C, KPAD) f32     fc weight, transposed + zero-padded
    # b_ref     : (1, KPAD) f32     fc bias, padded entries = -1e30
    # tgt_ref   : (tile_n, 1) i32   class targets (padded rows arbitrary)
    # loss_ref  : (1, 1, 1) f32     this tile's sum of per-sample CE losses
    # corr_ref  : (1, 1, 1) i32     this tile's number of correct predictions
    # pooled_ref: (tile_n, C) f32   scratch: avg-pooled features
    i = pl.program_id(0)
    tile_n, hw, _ = x_ref.shape
    kpad = wt_ref.shape[1]

    # ---- AdaptiveAvgPool2d((1,1)) -------------------------------------------
    # Fused cast-accumulate: reduce groups of `group_rows` samples over the
    # spatial axis straight into the f32 pooled scratch.  The bf16 tile is
    # never materialized as a full f32 copy (peak temp = one small group).
    gb = group_rows
    n_groups = tile_n // gb

    def pool_group(start, rows):
        blk = x_ref[pl.ds(start, rows), :, :].astype(jnp.float32)  # (rows,hw,C)
        pooled_ref[pl.ds(start, rows), :] = jnp.sum(blk, axis=1) * inv_hw

    if n_groups > 0:
        def body(g, carry):
            pool_group(pl.multiple_of(g * gb, gb), gb)
            return carry
        jax.lax.fori_loop(0, n_groups, body, 0, unroll=bool(n_groups <= 8))
    rem = tile_n - n_groups * gb
    if rem > 0:
        pool_group(n_groups * gb, rem)   # static tail slice

    pooled = pooled_ref[...]                                   # (tile_n, C) f32

    # ---- fc: cls_pred = pooled @ W^T + b  (K zero-padded to 128 lanes) ------
    logits = jnp.dot(pooled, wt_ref[...],
                     preferred_element_type=jnp.float32) + b_ref[...]

    t = tgt_ref[...]                                            # (tile_n, 1) i32
    col = jax.lax.broadcasted_iota(jnp.int32, (tile_n, kpad), 1)
    row = jax.lax.broadcasted_iota(jnp.int32, (tile_n, 1), 0)
    valid = (i * tile_n + row) < n_valid                        # mask edge rows

    # train branch: CE = m + lse - logits[target] (no materialized log-probs).
    # Padded classes have logit ~ -1e30 (f32) -> never the max, exp underflows
    # to exactly 0.  Garbage/NaN edge rows are removed by the select on `valid`.
    m = jnp.max(logits, axis=-1, keepdims=True)                 # (tile_n, 1)
    lse = jnp.log(jnp.sum(jnp.exp(logits - m), axis=-1, keepdims=True))
    onehot = (col == t).astype(jnp.float32)
    picked = jnp.sum(onehot * logits, axis=-1, keepdims=True)   # logits[target]
    per_row_loss = jnp.where(valid, m + lse - picked, 0.0)
    loss_ref[...] = jnp.reshape(jnp.sum(per_row_loss), (1, 1, 1))

    # eval branch: argmax over classes (first max index, like torch .max(dim=1))
    idx = jnp.where(logits == m, col, kpad)
    pred = jnp.min(idx, axis=-1, keepdims=True)                 # (tile_n, 1)
    corr = (valid & (pred == t)).astype(jnp.int32)
    corr_ref[...] = jnp.reshape(jnp.sum(corr), (1, 1, 1))


def _pick_tile_n(n, hw, c, itemsize, target_block_bytes):
    """Largest multiple-of-8 batch tile whose x-block stays under the budget."""
    row_bytes = hw * c * itemsize
    t = max(1, target_block_bytes // row_bytes)
    t = max(8, (int(t) // 8) * 8)
    return int(min(t, _round_up(n, 8)))


def opennet_regular_forward(features_nhwc, fc_weight, fc_bias, target,
                            *, tile_n=None, target_block_bytes=None):
    """
    features_nhwc: (N, H, W, C) feature map from feat_net (bf16 or f32), NHWC.
    fc_weight: (K, C) f32 ; fc_bias: (K,) f32 ; target: (N,) int.
    Returns (loss, correct) == (train branch, eval branch) of forward_regular.
    """
    N, H, W, C = features_nhwc.shape
    K = fc_weight.shape[0]
    HW = H * W
    KPAD = _round_up(max(K, 1), 128)

    # Channels-last already: just collapse spatial dims (no HBM transpose).
    x = features_nhwc.reshape(N, HW, C)
    itemsize = jnp.dtype(x.dtype).itemsize

    vmem_cap = _vmem_capacity_bytes()
    if target_block_bytes is None:
        # ~20% of VMEM per streaming block: ~25 MiB on v5e/v6e (128 MiB VMEM),
        # ~12 MiB on v7x (64 MiB per TC); double-buffered that is <50% of cap.
        target_block_bytes = max(4 << 20, min(vmem_cap // 5, 32 << 20))

    if tile_n is None:
        tile_n = _pick_tile_n(N, HW, C, itemsize, target_block_bytes)
        # Keep >= 2 grid steps so double-buffering overlaps DMA with compute
        # and the "parallel" batch axis can feed both v7x TensorCores.
        if N >= 16:
            tile_n = min(tile_n, max(8, _round_up(-(-N // 2), 8)))
    tile_n = int(max(1, min(int(tile_n), N)))
    num_tiles = -(-N // tile_n)            # cdiv; last block may be partial
    n_pad = num_tiles * tile_n

    # Targets are tiny: pad + reshape is cheap.  The feature map itself is NOT
    # padded (that was a full HBM copy); in-kernel `valid` masking handles the
    # garbage rows of the partial edge block.
    tgt = target.astype(jnp.int32)
    if n_pad != N:
        tgt = jnp.pad(tgt, ((0, n_pad - N),))
    tgt = tgt.reshape(n_pad, 1)

    # fc weight (K, C) -> (C, KPAD) zero-padded; bias -> (1, KPAD), pad = -1e30.
    # Keep f32: the -1e30 sentinel must never be downcast to bf16 (-> -inf).
    # TODO(synk): if called repeatedly with a fixed fc layer, precompute wt/b
    # once outside (or jit the caller so this pad/transpose constant-folds).
    wt = jnp.zeros((C, KPAD), jnp.float32).at[:, :K].set(
        jnp.transpose(fc_weight).astype(jnp.float32))
    b = jnp.full((1, KPAD), -1e30, jnp.float32).at[0, :K].set(
        fc_bias.astype(jnp.float32))

    # Batch rows pooled per inner step: caps the in-kernel f32 chunk at ~1 MiB.
    group_rows = ((1 << 20) // max(1, HW * C * 4)) // 8 * 8
    group_rows = int(min(tile_n, max(8, group_rows)))
    group_rows = max(1, group_rows)

    kernel = functools.partial(_opennet_regular_kernel, n_valid=N,
                               inv_hw=1.0 / HW, group_rows=group_rows)

    # VMEM budget from the actual buffers (double-buffered streams + scratch).
    tile_x_bytes = tile_n * HW * C * itemsize
    vmem_needed = (2 * tile_x_bytes                   # streamed feature tile x2
                   + 2 * (C * KPAD * 4)               # resident fc weight x2
                   + 2 * (8 * KPAD * 4)               # bias x2 (sublane padded)
                   + 2 * (max(tile_n, 8) * 128 * 4)   # targets x2 (lane padded)
                   + tile_n * C * 4                   # pooled scratch
                   + group_rows * HW * C * 4          # pooling chunk temp
                   + 8 * tile_n * KPAD * 4            # logits + iota/mask temps
                   + 4 * (8 * 128 * 4)                # tiny scalar outputs
                   + (4 << 20))                       # margin / internal scratch
    vmem_limit = int(min(max(vmem_needed, 16 << 20), int(vmem_cap * 0.9)))

    partial_loss, partial_correct = pl.pallas_call(
        kernel,
        out_shape=(
            jax.ShapeDtypeStruct((num_tiles, 1, 1), jnp.float32),
            jax.ShapeDtypeStruct((num_tiles, 1, 1), jnp.int32),
        ),
        grid=(num_tiles,),
        in_specs=[
            pl.BlockSpec((tile_n, HW, C), lambda i: (i, 0, 0)),   # streamed slab
            pl.BlockSpec((C, KPAD), lambda i: (0, 0)),            # resident
            pl.BlockSpec((1, KPAD), lambda i: (0, 0)),            # resident
            pl.BlockSpec((tile_n, 1), lambda i: (i, 0)),          # streamed (tiny)
        ],
        out_specs=(
            pl.BlockSpec((1, 1, 1), lambda i: (i, 0, 0)),
            pl.BlockSpec((1, 1, 1), lambda i: (i, 0, 0)),
        ),
        scratch_shapes=[pltpu.VMEM((tile_n, C), jnp.float32)],    # pooled acc
        compiler_params=pltpu.CompilerParams(
            dimension_semantics=("parallel",),       # megacore-shardable on v7x
            vmem_limit_bytes=vmem_limit),
    )(x, wt, b, tgt)

    loss = jnp.sum(partial_loss) / N                 # CE mean over true batch
    correct = jnp.sum(partial_correct)               # eval-branch correct count
    return loss, correct


def _reference(x_nhwc, fc_weight, fc_bias, target):
    """Pure-JAX reference mirroring OpenNet.forward_regular."""
    N = x_nhwc.shape[0]
    pooled = jnp.mean(x_nhwc.astype(jnp.float32), axis=(1, 2))   # avgpool
    logits = pooled @ fc_weight.T + fc_bias                      # fc
    logp = jax.nn.log_softmax(logits, axis=1)
    loss = -jnp.mean(logp[jnp.arange(N), target])                # CE, mean
    pred = jnp.argmax(logits, axis=1)
    correct = jnp.sum((pred == target).astype(jnp.int32))
    return loss, correct


if __name__ == "__main__":
    # Small shapes consistent with the module: feat_net (ResNet BasicBlock,
    # expansion=1) emits 512 channels; fc = Linear(512, num_classes).
    # N=12 with tile_n=8 exercises the multi-tile grid AND the new
    # partial-edge-block path (no jnp.pad of the feature map).
    N, C, H, W = 12, 512, 4, 4
    NUM_CLASSES = 10

    key = jax.random.PRNGKey(0)
    kx, kw, kb, kt = jax.random.split(key, 4)

    # Feature map as the (external) backbone would emit it on TPU: NHWC, bf16.
    x = jax.random.normal(kx, (N, H, W, C), dtype=jnp.float32).astype(jnp.bfloat16)
    bound = 1.0 / (C ** 0.5)  # PyTorch Linear default init range
    fc_weight = jax.random.uniform(kw, (NUM_CLASSES, C), jnp.float32, -bound, bound)
    fc_bias = jax.random.uniform(kb, (NUM_CLASSES,), jnp.float32, -bound, bound)
    target = jax.random.randint(kt, (N,), 0, NUM_CLASSES, dtype=jnp.int32)

    loss, correct = opennet_regular_forward(x, fc_weight, fc_bias, target, tile_n=8)
    jax.block_until_ready((loss, correct))

    ref_loss, ref_correct = _reference(x, fc_weight, fc_bias, target)
    assert jnp.allclose(loss, ref_loss, rtol=1e-5, atol=1e-5), (loss, ref_loss)
    assert int(correct) == int(ref_correct), (int(correct), int(ref_correct))

    print("KERNEL_OK")
</pallas_src>

<mosaic_0001>
module attributes {stable_mosaic.version = 11 : i64} {
  func.func @_opennet_regular_kernel(%arg0: i32, %arg1: memref<8x16x512xbf16, #tpu.memory_space<vmem>>, %arg2: memref<512x128xf32, #tpu.memory_space<vmem>>, %arg3: memref<1x128xf32, #tpu.memory_space<vmem>>, %arg4: memref<8x1xi32, #tpu.memory_space<vmem>>, %arg5: memref<1x1x1xf32, #tpu.memory_space<vmem>>, %arg6: memref<1x1x1xi32, #tpu.memory_space<vmem>>, %arg7: memref<8x512xf32, #tpu.memory_space<vmem>>) attributes {dimension_semantics = [#tpu.dimension_semantics<parallel>], iteration_bounds = array<i64: 2>, scalar_prefetch = 0 : i64, scratch_operands = 1 : i64, tpu.core_type = #tpu.core_type<tc>, window_params = [{transform_indices = @transform_0, window_bounds = array<i64: 8, 16, 512>}, {pipeline_mode = #tpu.pipeline_mode<synchronous>, transform_indices = @transform_1, window_bounds = array<i64: 512, 128>}, {pipeline_mode = #tpu.pipeline_mode<synchronous>, transform_indices = @transform_2, window_bounds = array<i64: 1, 128>}, {transform_indices = @transform_3, window_bounds = array<i64: 8, 1>}, {transform_indices = @transform_4, window_bounds = array<i64: 1, 1, 1>}, {transform_indices = @transform_5, window_bounds = array<i64: 1, 1, 1>}]} {
    %c0_i32 = arith.constant 0 : i32
    %c8_i32 = arith.constant 8 : i32
    %0 = arith.muli %c0_i32, %c8_i32 : i32
    %1 = tpu.assume_multiple %0, 8 : i32
    %2 = arith.index_cast %1 : i32 to index
    %c0 = arith.constant 0 : index
    %c0_0 = arith.constant 0 : index
    %3 = vector.load %arg1[%2, %c0, %c0_0] : memref<8x16x512xbf16, #tpu.memory_space<vmem>>, vector<8x16x512xbf16>
    %4 = arith.extf %3 : vector<8x16x512xbf16> to vector<8x16x512xf32>
    %cst = arith.constant dense<0.000000e+00> : vector<8x512xf32>
    %5 = vector.multi_reduction <add>, %4, %cst [1] : vector<8x16x512xf32> to vector<8x512xf32>
    %cst_1 = arith.constant 6.250000e-02 : f32
    %6 = vector.broadcast %cst_1 : f32 to vector<8x512xf32>
    %7 = arith.mulf %5, %6 : vector<8x512xf32>
    %8 = arith.index_cast %1 : i32 to index
    %c0_2 = arith.constant 0 : index
    %9 = vector.load %arg7[%8, %c0_2] : memref<8x512xf32, #tpu.memory_space<vmem>>, vector<8x512xf32>
    tpu.vector_store %arg7[%8, %c0_2], %7 {strides = array<i32>} : memref<8x512xf32, #tpu.memory_space<vmem>>, vector<8x512xf32>,
    %c1_i32 = arith.constant 1 : i32
    %c0_3 = arith.constant 0 : index
    %c0_4 = arith.constant 0 : index
    %10 = vector.load %arg7[%c0_3, %c0_4] : memref<8x512xf32, #tpu.memory_space<vmem>>, vector<8x512xf32>
    %c0_5 = arith.constant 0 : index
    %c0_6 = arith.constant 0 : index
    %11 = vector.load %arg2[%c0_5, %c0_6] : memref<512x128xf32, #tpu.memory_space<vmem>>, vector<512x128xf32>
    %cst_7 = arith.constant dense<0.000000e+00> : vector<8x128xf32>
    %12 = tpu.matmul %10, %11, %cst_7 {dimension_numbers = #tpu.dot_dimension_numbers<[1], [0], [0], [1], [0, 0, 1, 1], [], []>} : vector<8x512xf32>, vector<512x128xf32>, vector<8x128xf32> -> vector<8x128xf32>
    %c0_8 = arith.constant 0 : index
    %c0_9 = arith.constant 0 : index
    %13 = vector.load %arg3[%c0_8, %c0_9] : memref<1x128xf32, #tpu.memory_space<vmem>>, vector<1x128xf32>
    %14 = vector.broadcast %13 : vector<1x128xf32> to vector<8x128xf32>
    %15 = arith.addf %12, %14 : vector<8x128xf32>
    %c0_10 = arith.constant 0 : index
    %c0_11 = arith.constant 0 : index
    %16 = vector.load %arg4[%c0_10, %c0_11] : memref<8x1xi32, #tpu.memory_space<vmem>>, vector<8x1xi32>
    %17 = tpu.iota {dimensions = array<i32: 1>} : vector<8x128xi32>
    %18 = tpu.iota {dimensions = array<i32: 0>} : vector<8x1xi32>
    %c8_i32_12 = arith.constant 8 : i32
    %19 = arith.muli %arg0, %c8_i32_12 : i32
    %20 = vector.broadcast %19 : i32 to vector<8x1xi32>
    %21 = arith.addi %20, %18 : vector<8x1xi32>
    %c12_i32 = arith.constant 12 : i32
    %22 = vector.broadcast %c12_i32 : i32 to vector<8x1xi32>
    %23 = arith.cmpi slt, %21, %22 : vector<8x1xi32>
    %cst_13 = arith.constant dense<0xFF800000> : vector<8xf32>
    %24 = vector.multi_reduction <maximumf>, %15, %cst_13 [1] : vector<8x128xf32> to vector<8xf32>
    %25 = vector.shape_cast %24 : vector<8xf32> to vector<8x1xf32>
    %26 = vector.broadcast %25 : vector<8x1xf32> to vector<8x128xf32>
    %27 = arith.subf %15, %26 : vector<8x128xf32>
    %28 = math.exp %27 : vector<8x128xf32>
    %cst_14 = arith.constant dense<0.000000e+00> : vector<8xf32>
    %29 = vector.multi_reduction <add>, %28, %cst_14 [1] : vector<8x128xf32> to vector<8xf32>
    %30 = vector.shape_cast %29 : vector<8xf32> to vector<8x1xf32>
    %31 = math.log %30 : vector<8x1xf32>
    %32 = vector.broadcast %16 : vector<8x1xi32> to vector<8x128xi32>
    %33 = arith.cmpi eq, %17, %32 : vector<8x128xi32>
    %34 = arith.extui %33 : vector<8x128xi1> to vector<8x128xi32>
    %35 = arith.sitofp %34 : vector<8x128xi32> to vector<8x128xf32>
    %36 = arith.mulf %35, %15 : vector<8x128xf32>
    %cst_15 = arith.constant dense<0.000000e+00> : vector<8xf32>
    %37 = vector.multi_reduction <add>, %36, %cst_15 [1] : vector<8x128xf32> to vector<8xf32>
    %38 = vector.shape_cast %37 : vector<8xf32> to vector<8x1xf32>
    %39 = arith.addf %25, %31 : vector<8x1xf32>
    %40 = arith.subf %39, %38 : vector<8x1xf32>
    %cst_16 = arith.constant 0.000000e+00 : f32
    %41 = vector.broadcast %cst_16 : f32 to vector<8x1xf32>
    %42 = arith.select %23, %40, %41 : vector<8x1xi1>, vector<8x1xf32>
    %43 = vector.shape_cast %42 : vector<8x1xf32> to vector<1x8x1xf32>
    %cst_17 = arith.constant dense<0.000000e+00> : vector<1xf32>
    %44 = vector.multi_reduction <add>, %43, %cst_17 [1, 2] : vector<1x8x1xf32> to vector<1xf32>
    %45 = vector.shape_cast %44 : vector<1xf32> to vector<1x1x1xf32>
    %46 = vector.extract %45[0, 0, 0] : f32 from vector<1x1x1xf32>
    %47 = vector.broadcast %46 : f32 to vector<1x1x1xf32>
    %c0_18 = arith.constant 0 : index
    %c0_19 = arith.constant 0 : index
    %c0_20 = arith.constant 0 : index
    %48 = vector.load %arg5[%c0_18, %c0_19, %c0_20] : memref<1x1x1xf32, #tpu.memory_space<vmem>>, vector<1x1x1xf32>
    tpu.vector_store %arg5[%c0_18, %c0_19, %c0_20], %47 {strides = array<i32>} : memref<1x1x1xf32, #tpu.memory_space<vmem>>, vector<1x1x1xf32>,
    %49 = vector.broadcast %25 : vector<8x1xf32> to vector<8x128xf32>
    %50 = arith.cmpf oeq, %15, %49 : vector<8x128xf32>
    %c128_i32 = arith.constant 128 : i32
    %51 = vector.broadcast %c128_i32 : i32 to vector<8x128xi32>
    %52 = arith.select %50, %17, %51 : vector<8x128xi1>, vector<8x128xi32>
    %cst_21 = arith.constant dense<2147483647> : vector<8xi32>
    %53 = vector.multi_reduction <minsi>, %52, %cst_21 [1] : vector<8x128xi32> to vector<8xi32>
    %54 = vector.shape_cast %53 : vector<8xi32> to vector<8x1xi32>
    %55 = arith.cmpi eq, %54, %16 : vector<8x1xi32>
    %56 = arith.andi %23, %55 : vector<8x1xi1>
    %57 = arith.extui %56 : vector<8x1xi1> to vector<8x1xi32>
    %58 = vector.shape_cast %57 : vector<8x1xi32> to vector<1x8x1xi32>
    %cst_22 = arith.constant dense<0> : vector<1xi32>
    %59 = vector.multi_reduction <add>, %58, %cst_22 [1, 2] : vector<1x8x1xi32> to vector<1xi32>
    %60 = vector.shape_cast %59 : vector<1xi32> to vector<1x1x1xi32>
    %61 = vector.extract %60[0, 0, 0] : i32 from vector<1x1x1xi32>
    %62 = vector.broadcast %61 : i32 to vector<1x1x1xi32>
    %c0_23 = arith.constant 0 : index
    %c0_24 = arith.constant 0 : index
    %c0_25 = arith.constant 0 : index
    %63 = vector.load %arg6[%c0_23, %c0_24, %c0_25] : memref<1x1x1xi32, #tpu.memory_space<vmem>>, vector<1x1x1xi32>
    tpu.vector_store %arg6[%c0_23, %c0_24, %c0_25], %62 {strides = array<i32>} : memref<1x1x1xi32, #tpu.memory_space<vmem>>, vector<1x1x1xi32>,
    return
  }
  func.func @transform_0(%arg0: i32) -> (i32, i32, i32) {
    %c0_i32 = arith.constant 0 : i32
    %c0_i32_0 = arith.constant 0 : i32
    %c0_i32_1 = arith.constant 0 : i32
    return %arg0, %c0_i32, %c0_i32_0 : i32, i32, i32
  }
  func.func @transform_1(%arg0: i32) -> (i32, i32) {
    %c0_i32 = arith.constant 0 : i32
    %c0_i32_0 = arith.constant 0 : i32
    %c0_i32_1 = arith.constant 0 : i32
    return %c0_i32, %c0_i32_0 : i32, i32
  }
  func.func @transform_2(%arg0: i32) -> (i32, i32) {
    %c0_i32 = arith.constant 0 : i32
    %c0_i32_0 = arith.constant 0 : i32
    %c0_i32_1 = arith.constant 0 : i32
    return %c0_i32, %c0_i32_0 : i32, i32
  }
  func.func @transform_3(%arg0: i32) -> (i32, i32) {
    %c0_i32 = arith.constant 0 : i32
    %c0_i32_0 = arith.constant 0 : i32
    return %arg0, %c0_i32 : i32, i32
  }
  func.func @transform_4(%arg0: i32) -> (i32, i32, i32) {
    %c0_i32 = arith.constant 0 : i32
    %c0_i32_0 = arith.constant 0 : i32
    %c0_i32_1 = arith.constant 0 : i32
    return %arg0, %c0_i32, %c0_i32_0 : i32, i32, i32
  }
  func.func @transform_5(%arg0: i32) -> (i32, i32, i32) {
    %c0_i32 = arith.constant 0 : i32
    %c0_i32_0 = arith.constant 0 : i32
    %c0_i32_1 = arith.constant 0 : i32
    return %arg0, %c0_i32, %c0_i32_0 : i32, i32, i32
  }
}

</mosaic_0001>

<llo_original>
// kernel: tpu_custom_call.1
$region0: #{tpu_custom_call.1}
  #allocation0 [shape = 'u32[]', space=smem, size = 0x4, offset = 0x4, fixed_abs, tag = 'smem constant byte address 0x4 - core index']
  #allocation1 [shape = 'u32[144,128]{1,0:T(1,128)}', space=vmem, size = 0x12000, scoped, tag = 'internal scratch']
  #allocation2 [shape = 'f32[8,512]{1,0:T(8,128)}', space=vmem, size = 0x4000, scoped, tag = 'scratch operand']
  %s0 = inlined_call_operand.hbm [shape: bf16[12,16,512], index: 0, kind: input, shape index: {}]
  %s1 = inlined_call_operand.hbm [shape: f32[512,128], index: 1, kind: input, shape index: {}]
  %s2 = inlined_call_operand.vmem [shape: f32[1,128], index: 2, kind: input, shape index: {}]
  %s3 = inlined_call_operand.vmem [shape: s32[16,1], index: 3, kind: input, shape index: {}]
  %s4 = inlined_call_operand.vmem [shape: f32[2,1,1], index: 4, kind: output, shape index: {0}]
  %s5 = inlined_call_operand.vmem [shape: s32[2,1,1], index: 5, kind: output, shape index: {1}]
  %6 = xla_tuple %s4, %s5
  %s7 = sld [smem:[#allocation0]]
  $region65: #{tpu_custom_call.1} parent=0
    _
  %s9 = ssub.s32 1, %s7
  %s10 = scalar_select 0, %s9, %s7
  $region1: #{tpu_custom_call.1} parent=0
    #allocation3 [shape = 'u8[262144]{0}', space=vmem, size = 0x40000, scoped, tag = 'input window, operand 0']
    #allocation4 [shape = 's32[2]{0}', space=sflag, size = 0x8, scoped, tag = 'scoped memory for tpu_custom_call.1']
    #allocation5 [shape = 'u8[262144]{0}', space=vmem, size = 0x40000, scoped, tag = 'input window, operand 1, single buffered']
    #allocation6 [shape = 's32[1]{0}', space=sflag, size = 0x4, scoped, tag = 'scoped memory for tpu_custom_call.1']
    %11 = vsyncpa [#allocation4], 0
    %s12 = scalar_lea.sflag [#allocation4], 1
    %13 = vsyncpa %s12, 0
    %14 = vsyncpa [#allocation6], 0
    loop: start=0, step=1, limit=4
    $region2: #{tpu_custom_call.1} parent=1 // loop_pre_header
      _
    $region3: #{tpu_custom_call.1} parent=1 // loop_header
      %s16 = sphi 0, %s20
      %p17 = scmp.ge.s32.totalorder %s16, 4
      %s26 = sphi 0, %s28
      %s29 = sphi 0, %s26
      %s30 = sphi 0, %s29
      %s46 = sphi 0, %s30
      %s50 = sphi 0, %s50
      %s52 = sphi 0, %s50
      %s53 = sphi 0, %s52
      %s67 = sphi 0, %s53
      %s71 = sphi 0, %s71
      %s73 = sphi 0, %s71
      %s74 = sphi 0, %s73
      %s88 = sphi 0, %s74
      %s94 = sphi 0, %s96
      %s97 = sphi 0, %s94
      %s98 = sphi 0, %s97
      %s114 = sphi 0, %s98
      %s120 = sphi 0, %s122
      %s123 = sphi 0, %s120
      %s124 = sphi 0, %s123
      %s140 = sphi 0, %s124
      %s146 = sphi 0, %s148
      %s149 = sphi 0, %s146
      %s150 = sphi 0, %s149
      %s166 = sphi 0, %s150
    $region4: #{tpu_custom_call.1} parent=1 // loop_header_branch
      %19 = sbr.rel (%p17) target = $region8
    $region5: #{tpu_custom_call.1} parent=1 // loop_body
      %s21 = ssub.s32 %s16, 1
      %s22 = ssub.s32 %s16, 2
      %s23 = sadd.s32 %s16, 1
      %s24 = ssub.s32 %s16, %s23
      %p25 = scmp.eq.s32.totalorder %s24, 0
      %s27 = sadd.s32 %s26, 1
      %s28 = scalar_select %p25, %s26, %s27
      %p31 = pneg %p25
      %p32 = scmp.eq.s32.totalorder %s16, 1
      %p33 = por %p31, %p32
      %p34 = scmp.ne.s32.totalorder %s26, %s29
      %p35 = scmp.eq.s32.totalorder %s16, 0
      %p36 = por %p34, %p35
      %p37 = scmp.ne.s32.totalorder %s26, %s29
      %p38 = scmp.eq.s32.totalorder %s21, 1
      %p39 = por %p37, %p38
      %p40 = scmp.ne.s32.totalorder %s29, %s30
      %p41 = scmp.eq.s32.totalorder %s21, 0
      %p42 = por %p40, %p41
      %p43 = scmp.ne.s32.totalorder %s29, %s30
      %p44 = scmp.eq.s32.totalorder %s22, 1
      %p45 = por %p43, %p44
      %p47 = scmp.ne.s32.totalorder %s30, %s46
      %p48 = scmp.eq.s32.totalorder %s22, 0
      %p49 = por %p47, %p48
      %s51 = sadd.s32 %s50, 1
      %p54 = scmp.eq.s32.totalorder %s16, 1
      %p55 = scmp.ne.s32.totalorder %s50, %s52
      %p56 = scmp.eq.s32.totalorder %s16, 0
      %p57 = por %p55, %p56
      %p58 = scmp.ne.s32.totalorder %s50, %s52
      %p59 = scmp.eq.s32.totalorder %s21, 1
      %p60 = por %p58, %p59
      %p61 = scmp.ne.s32.totalorder %s52, %s53
      %p62 = scmp.eq.s32.totalorder %s21, 0
      %p63 = por %p61, %p62
      %p64 = scmp.ne.s32.totalorder %s52, %s53
      %p65 = scmp.eq.s32.totalorder %s22, 1
      %p66 = por %p64, %p65
      %p68 = scmp.ne.s32.totalorder %s53, %s67
      %p69 = scmp.eq.s32.totalorder %s22, 0
      %p70 = por %p68, %p69
      %s72 = sadd.s32 %s71, 1
      %p75 = scmp.eq.s32.totalorder %s16, 1
      %p76 = scmp.ne.s32.totalorder %s71, %s73
      %p77 = scmp.eq.s32.totalorder %s16, 0
      %p78 = por %p76, %p77
      %p79 = scmp.ne.s32.totalorder %s71, %s73
      %p80 = scmp.eq.s32.totalorder %s21, 1
      %p81 = por %p79, %p80
      %p82 = scmp.ne.s32.totalorder %s73, %s74
      %p83 = scmp.eq.s32.totalorder %s21, 0
      %p84 = por %p82, %p83
      %p85 = scmp.ne.s32.totalorder %s73, %s74
      %p86 = scmp.eq.s32.totalorder %s22, 1
      %p87 = por %p85, %p86
      %p89 = scmp.ne.s32.totalorder %s74, %s88
      %p90 = scmp.eq.s32.totalorder %s22, 0
      %p91 = por %p89, %p90
      %s92 = ssub.s32 %s16, %s23
      %p93 = scmp.eq.s32.totalorder %s92, 0
      %s95 = sadd.s32 %s94, 1
      %s96 = scalar_select %p93, %s94, %s95
      %p99 = pneg %p93
      %p100 = scmp.eq.s32.totalorder %s16, 1
      %p101 = por %p99, %p100
      %p102 = scmp.ne.s32.totalorder %s94, %s97
      %p103 = scmp.eq.s32.totalorder %s16, 0
      %p104 = por %p102, %p103
      %p105 = scmp.ne.s32.totalorder %s94, %s97
      %p106 = scmp.eq.s32.totalorder %s21, 1
      %p107 = por %p105, %p106
      %p108 = scmp.ne.s32.totalorder %s97, %s98
      %p109 = scmp.eq.s32.totalorder %s21, 0
      %p110 = por %p108, %p109
      %p111 = scmp.ne.s32.totalorder %s97, %s98
      %p112 = scmp.eq.s32.totalorder %s22, 1
      %p113 = por %p111, %p112
      %p115 = scmp.ne.s32.totalorder %s98, %s114
      %p116 = scmp.eq.s32.totalorder %s22, 0
      %p117 = por %p115, %p116
      %s118 = ssub.s32 %s16, %s23
      %p119 = scmp.eq.s32.totalorder %s118, 0
      %s121 = sadd.s32 %s120, 1
      %s122 = scalar_select %p119, %s120, %s121
      %p125 = pneg %p119
      %p126 = scmp.eq.s32.totalorder %s16, 1
      %p127 = por %p125, %p126
      %p128 = scmp.ne.s32.totalorder %s120, %s123
      %p129 = scmp.eq.s32.totalorder %s16, 0
      %p130 = por %p128, %p129
      %p131 = scmp.ne.s32.totalorder %s120, %s123
      %p132 = scmp.eq.s32.totalorder %s21, 1
      %p133 = por %p131, %p132
      %p134 = scmp.ne.s32.totalorder %s123, %s124
      %p135 = scmp.eq.s32.totalorder %s21, 0
      %p136 = por %p134, %p135
      %p137 = scmp.ne.s32.totalorder %s123, %s124
      %p138 = scmp.eq.s32.totalorder %s22, 1
      %p139 = por %p137, %p138
      %p141 = scmp.ne.s32.totalorder %s124, %s140
      %p142 = scmp.eq.s32.totalorder %s22, 0
      %p143 = por %p141, %p142
      %s144 = ssub.s32 %s16, %s23
      %p145 = scmp.eq.s32.totalorder %s144, 0
      %s147 = sadd.s32 %s146, 1
      %s148 = scalar_select %p145, %s146, %s147
      %p151 = pneg %p145
      %p152 = scmp.eq.s32.totalorder %s16, 1
      %p153 = por %p151, %p152
      %p154 = scmp.ne.s32.totalorder %s146, %s149
      %p155 = scmp.eq.s32.totalorder %s16, 0
      %p156 = por %p154, %p155
      %p157 = scmp.ne.s32.totalorder %s146, %s149
      %p158 = scmp.eq.s32.totalorder %s21, 1
      %p159 = por %p157, %p158
      %p160 = scmp.ne.s32.totalorder %s149, %s150
      %p161 = scmp.eq.s32.totalorder %s21, 0
      %p162 = por %p160, %p161
      %p163 = scmp.ne.s32.totalorder %s149, %s150
      %p164 = scmp.eq.s32.totalorder %s22, 1
      %p165 = por %p163, %p164
      %p167 = scmp.ne.s32.totalorder %s150, %s166
      %p168 = scmp.eq.s32.totalorder %s22, 0
      %p169 = por %p167, %p168
      %p170 = scmp.le.s32.totalorder 1, %s16
      %p171 = scmp.lt.s32.totalorder %s16, 3
      %p172 = pnand %p170, %p171
      %p173 = pneg %p172
      // Predicated region
      $region9: #{tpu_custom_call.1} parent=5 // pred_check
        _
      $region10: #{tpu_custom_call.1} parent=5 // pred_check_branch
        %175 = sbr.rel (%p172) target = $region12
      $region11: #{tpu_custom_call.1} parent=5 // pred_region
        %s176 = ssub.s32 %s16, 1
        // Predicated region
        $region13: #{tpu_custom_call.1} parent=11 // pred_check
          %p177 = pneg %p63
        $region14: #{tpu_custom_call.1} parent=11 // pred_check_branch
          %179 = sbr.rel (%p177) target = $region16
        $region15: #{tpu_custom_call.1} parent=11 // pred_region
          %s181 = ssub.s32 8192, 8192
          %182 = vsyncadd [#allocation6], %s181
          %s183 = sshll.u32 [#allocation5], 4
          %s184 = int_to_ptr.vmem [resolvable:$true] %s183
          %189 = dma.hbm_to_vmem [thread:$0]  %s1, 8192, %s184, [#allocation6], 128, 128, 8
        $region16: #{tpu_custom_call.1} parent=11 // pred_fallthru
          _
        // Predicated region
        $region17: #{tpu_custom_call.1} parent=11 // pred_check
          %p190 = pneg %p84
        $region18: #{tpu_custom_call.1} parent=11 // pred_check_branch
          %192 = sbr.rel (%p190) target = $region20
        $region19: #{tpu_custom_call.1} parent=11 // pred_region
          _
        $region20: #{tpu_custom_call.1} parent=11 // pred_fallthru
          _
      $region12: #{tpu_custom_call.1} parent=5 // pred_fallthru
        _
      %p193 = scmp.lt.s32.totalorder %s16, 2
      // Predicated region
      $region21: #{tpu_custom_call.1} parent=5 // pred_check
        %p194 = pneg %p193
      $region22: #{tpu_custom_call.1} parent=5 // pred_check_branch
        %196 = sbr.rel (%p194) target = $region24
      $region23: #{tpu_custom_call.1} parent=5 // pred_region
        // Predicated region
        $region25: #{tpu_custom_call.1} parent=23 // pred_check
          %p197 = pneg %p36
        $region26: #{tpu_custom_call.1} parent=23 // pred_check_branch
          %199 = sbr.rel (%p197) target = $region28
        $region27: #{tpu_custom_call.1} parent=23 // pred_region
          %s200 = sand.u32 %s26, 1
          %s201 = scalar_lea.sflag [#allocation4], %s200
          %s202 = sand.u32 %s26, 1
          %s203 = smul.addr %s202, 256
          %s204 = scalar_lea.vmem [#allocation3], %s203
          %s205 = smul.u32 8, %s16
          %s206 = ssub.s32 12, %s205
          %p207 = scmp.lt.s32.totalorder %s206, 8
          %s208 = scalar_select %p207, %s206, 8
          %s209 = smul.u32 64, %s208
          %s210 = smul.u32 %s209, 2
          %s211 = smul.u32 %s210, 4
          %s213 = ssub.s32 4096, %s211
          %214 = vsyncadd %s201, %s213
          %p215 = scmp.ne.s32.totalorder 0, %s211
          %s216 = smul.addr %s205, 8
          %s217 = smul.addr %s216, 64
          %s218 = scalar_lea.hbm %s0, %s217
          %s219 = smul.u32 %s208, 2
          %s220 = smul.u32 16, %s219
          %s221 = sshll.u32 %s204, 4
          %s222 = int_to_ptr.vmem [resolvable:$true] %s221
          %s223 = sshll.u32 %s220, 4
          %227 = dma.hbm_to_vmem [thread:$0]  (%p215), %s218, %s223, %s222, %s201, 256, 256, 16
        $region28: #{tpu_custom_call.1} parent=23 // pred_fallthru
          _
        // Predicated region
        $region29: #{tpu_custom_call.1} parent=23 // pred_check
          %p228 = pneg %p104
        $region30: #{tpu_custom_call.1} parent=23 // pred_check_branch
          %230 = sbr.rel (%p228) target = $region32
        $region31: #{tpu_custom_call.1} parent=23 // pred_region
          %p231 = scmp.lt.s32.totalorder %s16, 1
          %s232 = scalar_select %p231, %s16, 1
          %s233 = smul.addr %s232, 8
          %s234 = scalar_lea.vmem %s3, %s233
        $region32: #{tpu_custom_call.1} parent=23 // pred_fallthru
          _
      $region24: #{tpu_custom_call.1} parent=5 // pred_fallthru
        _
      %p235 = scmp.le.s32.totalorder 1, %s16
      %p236 = scmp.lt.s32.totalorder %s16, 3
      %p237 = pnand %p235, %p236
      %p238 = pneg %p237
      // Predicated region
      $region33: #{tpu_custom_call.1} parent=5 // pred_check
        _
      $region34: #{tpu_custom_call.1} parent=5 // pred_check_branch
        %240 = sbr.rel (%p237) target = $region36
      $region35: #{tpu_custom_call.1} parent=5 // pred_region
        %s241 = ssub.s32 %s16, 1
        %s242 = sand.u32 %s29, 1
        %s243 = scalar_lea.sflag [#allocation4], %s242
        %s244 = sand.u32 %s29, 1
        %s245 = smul.addr %s244, 256
        %s246 = scalar_lea.vmem [#allocation3], %s245
        // Predicated region
        $region37: #{tpu_custom_call.1} parent=35 // pred_check
          %p247 = pneg %p42
        $region38: #{tpu_custom_call.1} parent=35 // pred_check_branch
          %249 = sbr.rel (%p247) target = $region40
        $region39: #{tpu_custom_call.1} parent=35 // pred_region
          %250 = dma.done %s243, 4096
        $region40: #{tpu_custom_call.1} parent=35 // pred_fallthru
          _
        // Predicated region
        $region41: #{tpu_custom_call.1} parent=35 // pred_check
          %p251 = pneg %p63
        $region42: #{tpu_custom_call.1} parent=35 // pred_check_branch
          %253 = sbr.rel (%p251) target = $region44
        $region43: #{tpu_custom_call.1} parent=35 // pred_region
          %254 = dma.done [#allocation6], 8192
        $region44: #{tpu_custom_call.1} parent=35 // pred_fallthru
          _
        %s255 = sand.u32 %s29, 1
        %s256 = scalar_lea.sflag [#allocation4], %s255
        %s257 = sand.u32 %s29, 1
        %s258 = smul.addr %s257, 256
        %s259 = scalar_lea.vmem [#allocation3], %s258
        %p260 = pneg %p42
        %p261 = pneg %p39
        %p262 = pneg %p63
        %p263 = pneg %p60
        %p264 = pneg %p84
        %p265 = pneg %p81
        %p266 = scmp.lt.s32.totalorder %s21, 1
        %s267 = scalar_select %p266, %s21, 1
        %s268 = smul.addr %s267, 8
        %s269 = scalar_lea.vmem %s3, %s268
        %p270 = pneg %p110
        %p271 = pneg %p107
        %p272 = pneg %p136
        %p273 = pneg %p133
        %p274 = scmp.lt.s32.totalorder %s21, 1
        %s275 = scalar_select %p274, %s21, 1
        %s276 = scalar_lea.vmem %s4, %s275
        %p277 = pneg %p162
        %p278 = pneg %p159
        %p279 = scmp.lt.s32.totalorder %s21, 1
        %s280 = scalar_select %p279, %s21, 1
        %s281 = scalar_lea.vmem %s5, %s280
        %s282 = smul.u32 8, %s21
        %s283 = ssub.s32 12, %s282
        %p284 = scmp.lt.s32.totalorder %s283, 8
        %s285 = scalar_select %p284, %s283, 8
        %s286 = smul.u32 64, %s285
        %s287 = smul.u32 %s286, 2
        %s288 = smul.u32 %s287, 4
        %p289 = scmp.lt.s32.totalorder %s21, 1
        %s290 = scalar_select %p289, %s21, 1
        %s291 = smul.addr %s290, 8
        %s292 = scalar_lea.vmem %s3, %s291
        %p293 = scmp.lt.s32.totalorder %s21, 1
        %s294 = scalar_select %p293, %s21, 1
        %s295 = scalar_lea.vmem %s4, %s294
        %p296 = scmp.lt.s32.totalorder %s21, 1
        %s297 = scalar_select %p296, %s21, 1
        %s298 = scalar_lea.vmem %s5, %s297
        %s299 = smul.u32 0, 8
        %s300 = smul.addr %s299, 4
        %s301 = scalar_lea.vmem %s246, %s300 [#allocation3]
        %v302 = vld [vmem:[%s301] sm:$0xff]
        %v303 = vld [vmem:[%s301 + $0x8] sm:$0xff]
        %v304 = vld [vmem:[%s301 + $0x10] sm:$0xff]
        %v305 = vld [vmem:[%s301 + $0x18] sm:$0xff]
        %v306 = vld [vmem:[%s301 + $0x20] sm:$0xff]
        %v307 = vld [vmem:[%s301 + $0x28] sm:$0xff]
        %v308 = vld [vmem:[%s301 + $0x30] sm:$0xff]
        %v309 = vld [vmem:[%s301 + $0x38] sm:$0xff]
        %v310 = vld [vmem:[%s301 + $0x40] sm:$0xff]
        %v311 = vld [vmem:[%s301 + $0x48] sm:$0xff]
        %v312 = vld [vmem:[%s301 + $0x50] sm:$0xff]
        %v313 = vld [vmem:[%s301 + $0x58] sm:$0xff]
        %v314 = vld [vmem:[%s301 + $0x60] sm:$0xff]
        %v315 = vld [vmem:[%s301 + $0x68] sm:$0xff]
        %v316 = vld [vmem:[%s301 + $0x70] sm:$0xff]
        %v317 = vld [vmem:[%s301 + $0x78] sm:$0xff]
        %v318 = vld [vmem:[%s301 + $0x80] sm:$0xff]
        %v319 = vld [vmem:[%s301 + $0x88] sm:$0xff]
        %v320 = vld [vmem:[%s301 + $0x90] sm:$0xff]
        %v321 = vld [vmem:[%s301 + $0x98] sm:$0xff]
        %v322 = vld [vmem:[%s301 + $0xa0] sm:$0xff]
        %v323 = vld [vmem:[%s301 + $0xa8] sm:$0xff]
        %v324 = vld [vmem:[%s301 + $0xb0] sm:$0xff]
        %v325 = vld [vmem:[%s301 + $0xb8] sm:$0xff]
        %v326 = vld [vmem:[%s301 + $0xc0] sm:$0xff]
        %v327 = vld [vmem:[%s301 + $0xc8] sm:$0xff]
        %v328 = vld [vmem:[%s301 + $0xd0] sm:$0xff]
        %v329 = vld [vmem:[%s301 + $0xd8] sm:$0xff]
        %v330 = vld [vmem:[%s301 + $0xe0] sm:$0xff]
        %v331 = vld [vmem:[%s301 + $0xe8] sm:$0xff]
        %v332 = vld [vmem:[%s301 + $0xf0] sm:$0xff]
        %v333 = vld [vmem:[%s301 + $0xf8] sm:$0xff]
        %v334 = vunpack.c.l.bf16 %v302
        %v335 = vunpack.c.h.bf16 %v302
        %v336 = vunpack.c.l.bf16 %v303
        %v337 = vunpack.c.h.bf16 %v303
        %v338 = vunpack.c.l.bf16 %v304
        %v339 = vunpack.c.h.bf16 %v304
        %v340 = vunpack.c.l.bf16 %v305
        %v341 = vunpack.c.h.bf16 %v305
        %v342 = vunpack.c.l.bf16 %v306
        %v343 = vunpack.c.h.bf16 %v306
        %v344 = vunpack.c.l.bf16 %v307
        %v345 = vunpack.c.h.bf16 %v307
        %v346 = vunpack.c.l.bf16 %v308
        %v347 = vunpack.c.h.bf16 %v308
        %v348 = vunpack.c.l.bf16 %v309
        %v349 = vunpack.c.h.bf16 %v309
        %v350 = vunpack.c.l.bf16 %v310
        %v351 = vunpack.c.h.bf16 %v310
        %v352 = vunpack.c.l.bf16 %v311
        %v353 = vunpack.c.h.bf16 %v311
        %v354 = vunpack.c.l.bf16 %v312
        %v355 = vunpack.c.h.bf16 %v312
        %v356 = vunpack.c.l.bf16 %v313
        %v357 = vunpack.c.h.bf16 %v313
        %v358 = vunpack.c.l.bf16 %v314
        %v359 = vunpack.c.h.bf16 %v314
        %v360 = vunpack.c.l.bf16 %v315
        %v361 = vunpack.c.h.bf16 %v315
        %v362 = vunpack.c.l.bf16 %v316
        %v363 = vunpack.c.h.bf16 %v316
        %v364 = vunpack.c.l.bf16 %v317
        %v365 = vunpack.c.h.bf16 %v317
        %v366 = vunpack.c.l.bf16 %v318
        %v367 = vunpack.c.h.bf16 %v318
        %v368 = vunpack.c.l.bf16 %v319
        %v369 = vunpack.c.h.bf16 %v319
        %v370 = vunpack.c.l.bf16 %v320
        %v371 = vunpack.c.h.bf16 %v320
        %v372 = vunpack.c.l.bf16 %v321
        %v373 = vunpack.c.h.bf16 %v321
        %v374 = vunpack.c.l.bf16 %v322
        %v375 = vunpack.c.h.bf16 %v322
        %v376 = vunpack.c.l.bf16 %v323
        %v377 = vunpack.c.h.bf16 %v323
        %v378 = vunpack.c.l.bf16 %v324
        %v379 = vunpack.c.h.bf16 %v324
        %v380 = vunpack.c.l.bf16 %v325
        %v381 = vunpack.c.h.bf16 %v325
        %v382 = vunpack.c.l.bf16 %v326
        %v383 = vunpack.c.h.bf16 %v326
        %v384 = vunpack.c.l.bf16 %v327
        %v385 = vunpack.c.h.bf16 %v327
        %v386 = vunpack.c.l.bf16 %v328
        %v387 = vunpack.c.h.bf16 %v328
        %v388 = vunpack.c.l.bf16 %v329
        %v389 = vunpack.c.h.bf16 %v329
        %v390 = vunpack.c.l.bf16 %v330
        %v391 = vunpack.c.h.bf16 %v330
        %v392 = vunpack.c.l.bf16 %v331
        %v393 = vunpack.c.h.bf16 %v331
        %v394 = vunpack.c.l.bf16 %v332
        %v395 = vunpack.c.h.bf16 %v332
        %v396 = vunpack.c.l.bf16 %v333
        %v397 = vunpack.c.h.bf16 %v333
        %v398 = vadd.f32 %v334, %v338
        %v399 = vrot.slane %v398, 4
        %v400 = vadd.f32 %v398, %v399
        %v401 = vrot.slane %v400, 2
        %v402 = vadd.f32 %v400, %v401
        %v403 = vrot.slane %v402, 1
        %v404 = vadd.f32 %v402, %v403
        %v405 = vadd.f32 %v335, %v339
        %v406 = vrot.slane %v405, 4
        %v407 = vadd.f32 %v405, %v406
        %v408 = vrot.slane %v407, 2
        %v409 = vadd.f32 %v407, %v408
        %v410 = vrot.slane %v409, 1
        %v411 = vadd.f32 %v409, %v410
        %v412 = vadd.f32 %v336, %v340
        %v413 = vrot.slane %v412, 4
        %v414 = vadd.f32 %v412, %v413
        %v415 = vrot.slane %v414, 2
        %v416 = vadd.f32 %v414, %v415
        %v417 = vrot.slane %v416, 1
        %v418 = vadd.f32 %v416, %v417
        %v419 = vadd.f32 %v337, %v341
        %v420 = vrot.slane %v419, 4
        %v421 = vadd.f32 %v419, %v420
        %v422 = vrot.slane %v421, 2
        %v423 = vadd.f32 %v421, %v422
        %v424 = vrot.slane %v423, 1
        %v425 = vadd.f32 %v423, %v424
        %v426 = vadd.f32 %v342, %v346
        %v427 = vrot.slane %v426, 4
        %v428 = vadd.f32 %v426, %v427
        %v429 = vrot.slane %v428, 2
        %v430 = vadd.f32 %v428, %v429
        %v431 = vrot.slane %v430, 1
        %v432 = vadd.f32 %v430, %v431
        %v433 = vadd.f32 %v343, %v347
        %v434 = vrot.slane %v433, 4
        %v435 = vadd.f32 %v433, %v434
        %v436 = vrot.slane %v435, 2
        %v437 = vadd.f32 %v435, %v436
        %v438 = vrot.slane %v437, 1
        %v439 = vadd.f32 %v437, %v438
        %v440 = vadd.f32 %v344, %v348
        %v441 = vrot.slane %v440, 4
        %v442 = vadd.f32 %v440, %v441
        %v443 = vrot.slane %v442, 2
        %v444 = vadd.f32 %v442, %v443
        %v445 = vrot.slane %v444, 1
        %v446 = vadd.f32 %v444, %v445
        %v447 = vadd.f32 %v345, %v349
        %v448 = vrot.slane %v447, 4
        %v449 = vadd.f32 %v447, %v448
        %v450 = vrot.slane %v449, 2
        %v451 = vadd.f32 %v449, %v450
        %v452 = vrot.slane %v451, 1
        %v453 = vadd.f32 %v451, %v452
        %v454 = vadd.f32 %v350, %v354
        %v455 = vrot.slane %v454, 4
        %v456 = vadd.f32 %v454, %v455
        %v457 = vrot.slane %v456, 2
        %v458 = vadd.f32 %v456, %v457
        %v459 = vrot.slane %v458, 1
        %v460 = vadd.f32 %v458, %v459
        %v461 = vadd.f32 %v351, %v355
        %v462 = vrot.slane %v461, 4
        %v463 = vadd.f32 %v461, %v462
        %v464 = vrot.slane %v463, 2
        %v465 = vadd.f32 %v463, %v464
        %v466 = vrot.slane %v465, 1
        %v467 = vadd.f32 %v465, %v466
        %v468 = vadd.f32 %v352, %v356
        %v469 = vrot.slane %v468, 4
        %v470 = vadd.f32 %v468, %v469
        %v471 = vrot.slane %v470, 2
        %v472 = vadd.f32 %v470, %v471
        %v473 = vrot.slane %v472, 1
        %v474 = vadd.f32 %v472, %v473
        %v475 = vadd.f32 %v353, %v357
        %v476 = vrot.slane %v475, 4
        %v477 = vadd.f32 %v475, %v476
        %v478 = vrot.slane %v477, 2
        %v479 = vadd.f32 %v477, %v478
        %v480 = vrot.slane %v479, 1
        %v481 = vadd.f32 %v479, %v480
        %v482 = vadd.f32 %v358, %v362
        %v483 = vrot.slane %v482, 4
        %v484 = vadd.f32 %v482, %v483
        %v485 = vrot.slane %v484, 2
        %v486 = vadd.f32 %v484, %v485
        %v487 = vrot.slane %v486, 1
        %v488 = vadd.f32 %v486, %v487
        %v489 = vadd.f32 %v359, %v363
        %v490 = vrot.slane %v489, 4
        %v491 = vadd.f32 %v489, %v490
        %v492 = vrot.slane %v491, 2
        %v493 = vadd.f32 %v491, %v492
        %v494 = vrot.slane %v493, 1
        %v495 = vadd.f32 %v493, %v494
        %v496 = vadd.f32 %v360, %v364
        %v497 = vrot.slane %v496, 4
        %v498 = vadd.f32 %v496, %v497
        %v499 = vrot.slane %v498, 2
        %v500 = vadd.f32 %v498, %v499
        %v501 = vrot.slane %v500, 1
        %v502 = vadd.f32 %v500, %v501
        %v503 = vadd.f32 %v361, %v365
        %v504 = vrot.slane %v503, 4
        %v505 = vadd.f32 %v503, %v504
        %v506 = vrot.slane %v505, 2
        %v507 = vadd.f32 %v505, %v506
        %v508 = vrot.slane %v507, 1
        %v509 = vadd.f32 %v507, %v508
        %v510 = vadd.f32 %v366, %v370
        %v511 = vrot.slane %v510, 4
        %v512 = vadd.f32 %v510, %v511
        %v513 = vrot.slane %v512, 2
        %v514 = vadd.f32 %v512, %v513
        %v515 = vrot.slane %v514, 1
        %v516 = vadd.f32 %v514, %v515
        %v517 = vadd.f32 %v367, %v371
        %v518 = vrot.slane %v517, 4
        %v519 = vadd.f32 %v517, %v518
        %v520 = vrot.slane %v519, 2
        %v521 = vadd.f32 %v519, %v520
        %v522 = vrot.slane %v521, 1
        %v523 = vadd.f32 %v521, %v522
        %v524 = vadd.f32 %v368, %v372
        %v525 = vrot.slane %v524, 4
        %v526 = vadd.f32 %v524, %v525
        %v527 = vrot.slane %v526, 2
        %v528 = vadd.f32 %v526, %v527
        %v529 = vrot.slane %v528, 1
        %v530 = vadd.f32 %v528, %v529
        %v531 = vadd.f32 %v369, %v373
        %v532 = vrot.slane %v531, 4
        %v533 = vadd.f32 %v531, %v532
        %v534 = vrot.slane %v533, 2
        %v535 = vadd.f32 %v533, %v534
        %v536 = vrot.slane %v535, 1
        %v537 = vadd.f32 %v535, %v536
        %v538 = vadd.f32 %v374, %v378
        %v539 = vrot.slane %v538, 4
        %v540 = vadd.f32 %v538, %v539
        %v541 = vrot.slane %v540, 2
        %v542 = vadd.f32 %v540, %v541
        %v543 = vrot.slane %v542, 1
        %v544 = vadd.f32 %v542, %v543
        %v545 = vadd.f32 %v375, %v379
        %v546 = vrot.slane %v545, 4
        %v547 = vadd.f32 %v545, %v546
        %v548 = vrot.slane %v547, 2
        %v549 = vadd.f32 %v547, %v548
        %v550 = vrot.slane %v549, 1
        %v551 = vadd.f32 %v549, %v550
        %v552 = vadd.f32 %v376, %v380
        %v553 = vrot.slane %v552, 4
        %v554 = vadd.f32 %v552, %v553
        %v555 = vrot.slane %v554, 2
        %v556 = vadd.f32 %v554, %v555
        %v557 = vrot.slane %v556, 1
        %v558 = vadd.f32 %v556, %v557
        %v559 = vadd.f32 %v377, %v381
        %v560 = vrot.slane %v559, 4
        %v561 = vadd.f32 %v559, %v560
        %v562 = vrot.slane %v561, 2
        %v563 = vadd.f32 %v561, %v562
        %v564 = vrot.slane %v563, 1
        %v565 = vadd.f32 %v563, %v564
        %v566 = vadd.f32 %v382, %v386
        %v567 = vrot.slane %v566, 4
        %v568 = vadd.f32 %v566, %v567
        %v569 = vrot.slane %v568, 2
        %v570 = vadd.f32 %v568, %v569
        %v571 = vrot.slane %v570, 1
        %v572 = vadd.f32 %v570, %v571
        %v573 = vadd.f32 %v383, %v387
        %v574 = vrot.slane %v573, 4
        %v575 = vadd.f32 %v573, %v574
        %v576 = vrot.slane %v575, 2
        %v577 = vadd.f32 %v575, %v576
        %v578 = vrot.slane %v577, 1
        %v579 = vadd.f32 %v577, %v578
        %v580 = vadd.f32 %v384, %v388
        %v581 = vrot.slane %v580, 4
        %v582 = vadd.f32 %v580, %v581
        %v583 = vrot.slane %v582, 2
        %v584 = vadd.f32 %v582, %v583
        %v585 = vrot.slane %v584, 1
        %v586 = vadd.f32 %v584, %v585
        %v587 = vadd.f32 %v385, %v389
        %v588 = vrot.slane %v587, 4
        %v589 = vadd.f32 %v587, %v588
        %v590 = vrot.slane %v589, 2
        %v591 = vadd.f32 %v589, %v590
        %v592 = vrot.slane %v591, 1
        %v593 = vadd.f32 %v591, %v592
        %v594 = vadd.f32 %v390, %v394
        %v595 = vrot.slane %v594, 4
        %v596 = vadd.f32 %v594, %v595
        %v597 = vrot.slane %v596, 2
        %v598 = vadd.f32 %v596, %v597
        %v599 = vrot.slane %v598, 1
        %v600 = vadd.f32 %v598, %v599
        %v601 = vadd.f32 %v391, %v395
        %v602 = vrot.slane %v601, 4
        %v603 = vadd.f32 %v601, %v602
        %v604 = vrot.slane %v603, 2
        %v605 = vadd.f32 %v603, %v604
        %v606 = vrot.slane %v605, 1
        %v607 = vadd.f32 %v605, %v606
        %v608 = vadd.f32 %v392, %v396
        %v609 = vrot.slane %v608, 4
        %v610 = vadd.f32 %v608, %v609
        %v611 = vrot.slane %v610, 2
        %v612 = vadd.f32 %v610, %v611
        %v613 = vrot.slane %v612, 1
        %v614 = vadd.f32 %v612, %v613
        %v615 = vadd.f32 %v393, %v397
        %v616 = vrot.slane %v615, 4
        %v617 = vadd.f32 %v615, %v616
        %v618 = vrot.slane %v617, 2
        %v619 = vadd.f32 %v617, %v618
        %v620 = vrot.slane %v619, 1
        %v621 = vadd.f32 %v619, %v620
        %v622 = vmul.f32 %v404, 0.0625
        %v623 = vmul.f32 %v411, 0.0625
        %v624 = vmul.f32 %v418, 0.0625
        %v625 = vmul.f32 %v425, 0.0625
        %v626 = vmul.f32 %v432, 0.0625
        %v627 = vmul.f32 %v439, 0.0625
        %v628 = vmul.f32 %v446, 0.0625
        %v629 = vmul.f32 %v453, 0.0625
        %v630 = vmul.f32 %v460, 0.0625
        %v631 = vmul.f32 %v467, 0.0625
        %v632 = vmul.f32 %v474, 0.0625
        %v633 = vmul.f32 %v481, 0.0625
        %v634 = vmul.f32 %v488, 0.0625
        %v635 = vmul.f32 %v495, 0.0625
        %v636 = vmul.f32 %v502, 0.0625
        %v637 = vmul.f32 %v509, 0.0625
        %v638 = vmul.f32 %v516, 0.0625
        %v639 = vmul.f32 %v523, 0.0625
        %v640 = vmul.f32 %v530, 0.0625
        %v641 = vmul.f32 %v537, 0.0625
        %v642 = vmul.f32 %v544, 0.0625
        %v643 = vmul.f32 %v551, 0.0625
        %v644 = vmul.f32 %v558, 0.0625
        %v645 = vmul.f32 %v565, 0.0625
        %v646 = vmul.f32 %v572, 0.0625
        %v647 = vmul.f32 %v579, 0.0625
        %v648 = vmul.f32 %v586, 0.0625
        %v649 = vmul.f32 %v593, 0.0625
        %v650 = vmul.f32 %v600, 0.0625
        %v651 = vmul.f32 %v607, 0.0625
        %v652 = vmul.f32 %v614, 0.0625
        %v653 = vmul.f32 %v621, 0.0625
        %vm686 = vcmask 1041409
        %v687 = vsel %vm686, %v626, %v622
        %vm688 = vcmask 1042434
        %v689 = vsel %vm688, %v630, %v687
        %vm690 = vcmask 1043459
        %v691 = vsel %vm690, %v634, %v689
        %vm692 = vcmask 1044484
        %v693 = vsel %vm692, %v638, %v691
        %vm694 = vcmask 1045509
        %v695 = vsel %vm694, %v642, %v693
        %vm696 = vcmask 1046534
        %v697 = vsel %vm696, %v646, %v695
        %vm698 = vcmask 1047559
        %v699 = vsel %vm698, %v650, %v697
        %v700 = vsel %vm686, %v627, %v623
        %v701 = vsel %vm688, %v631, %v700
        %v702 = vsel %vm690, %v635, %v701
        %v703 = vsel %vm692, %v639, %v702
        %v704 = vsel %vm694, %v643, %v703
        %v705 = vsel %vm696, %v647, %v704
        %v706 = vsel %vm698, %v651, %v705
        %v707 = vsel %vm686, %v628, %v624
        %v708 = vsel %vm688, %v632, %v707
        %v709 = vsel %vm690, %v636, %v708
        %v710 = vsel %vm692, %v640, %v709
        %v711 = vsel %vm694, %v644, %v710
        %v712 = vsel %vm696, %v648, %v711
        %v713 = vsel %vm698, %v652, %v712
        %v714 = vsel %vm686, %v629, %v625
        %v715 = vsel %vm688, %v633, %v714
        %v716 = vsel %vm690, %v637, %v715
        %v717 = vsel %vm692, %v641, %v716
        %v718 = vsel %vm694, %v645, %v717
        %v719 = vsel %vm696, %v649, %v718
        %v720 = vsel %vm698, %v653, %v719
        %s725 = smul.u32 0, 4
        %s726 = smul.addr %s725, 8
        %s727 = scalar_lea.vmem [#allocation2], %s726
        %728 = vst [vmem:[%s727] sm:$0xff] %v699
        %729 = vst [vmem:[%s727 + $0x8] sm:$0xff] %v706
        %730 = vst [vmem:[%s727 + $0x10] sm:$0xff] %v713
        %731 = vst [vmem:[%s727 + $0x18] sm:$0xff] %v720
        %v732 = vld [vmem:[#allocation2] sm:$0xff]
        %v733 = vld [vmem:[#allocation2 + $0x8] sm:$0xff]
        %v734 = vld [vmem:[#allocation2 + $0x10] sm:$0xff]
        %v735 = vld [vmem:[#allocation2 + $0x18] sm:$0xff]
        %v736 = vld [vmem:[#allocation5] sm:$0xff]
        %v737 = vld [vmem:[#allocation5 + $0x8] sm:$0xff]
        %v738 = vld [vmem:[#allocation5 + $0x10] sm:$0xff]
        %v739 = vld [vmem:[#allocation5 + $0x18] sm:$0xff]
        %v740 = vld [vmem:[#allocation5 + $0x20] sm:$0xff]
        %v741 = vld [vmem:[#allocation5 + $0x28] sm:$0xff]
        %v742 = vld [vmem:[#allocation5 + $0x30] sm:$0xff]
        %v743 = vld [vmem:[#allocation5 + $0x38] sm:$0xff]
        %v744 = vld [vmem:[#allocation5 + $0x40] sm:$0xff]
        %v745 = vld [vmem:[#allocation5 + $0x48] sm:$0xff]
        %v746 = vld [vmem:[#allocation5 + $0x50] sm:$0xff]
        %v747 = vld [vmem:[#allocation5 + $0x58] sm:$0xff]
        %v748 = vld [vmem:[#allocation5 + $0x60] sm:$0xff]
        %v749 = vld [vmem:[#allocation5 + $0x68] sm:$0xff]
        %v750 = vld [vmem:[#allocation5 + $0x70] sm:$0xff]
        %v751 = vld [vmem:[#allocation5 + $0x78] sm:$0xff]
        %v752 = vld [vmem:[#allocation5 + $0x80] sm:$0xff]
        %v753 = vld [vmem:[#allocation5 + $0x88] sm:$0xff]
        %v754 = vld [vmem:[#allocation5 + $0x90] sm:$0xff]
        %v755 = vld [vmem:[#allocation5 + $0x98] sm:$0xff]
        %v756 = vld [vmem:[#allocation5 + $0xa0] sm:$0xff]
        %v757 = vld [vmem:[#allocation5 + $0xa8] sm:$0xff]
        %v758 = vld [vmem:[#allocation5 + $0xb0] sm:$0xff]
        %v759 = vld [vmem:[#allocation5 + $0xb8] sm:$0xff]
        %v760 = vld [vmem:[#allocation5 + $0xc0] sm:$0xff]
        %v761 = vld [vmem:[#allocation5 + $0xc8] sm:$0xff]
        %v762 = vld [vmem:[#allocation5 + $0xd0] sm:$0xff]
        %v763 = vld [vmem:[#allocation5 + $0xd8] sm:$0xff]
        %v764 = vld [vmem:[#allocation5 + $0xe0] sm:$0xff]
        %v765 = vld [vmem:[#allocation5 + $0xe8] sm:$0xff]
        %v766 = vld [vmem:[#allocation5 + $0xf0] sm:$0xff]
        %v767 = vld [vmem:[#allocation5 + $0xf8] sm:$0xff]
        %v768 = vld [vmem:[#allocation5 + $0x100] sm:$0xff]
        %v769 = vld [vmem:[#allocation5 + $0x108] sm:$0xff]
        %v770 = vld [vmem:[#allocation5 + $0x110] sm:$0xff]
        %v771 = vld [vmem:[#allocation5 + $0x118] sm:$0xff]
        %v772 = vld [vmem:[#allocation5 + $0x120] sm:$0xff]
        %v773 = vld [vmem:[#allocation5 + $0x128] sm:$0xff]
        %v774 = vld [vmem:[#allocation5 + $0x130] sm:$0xff]
        %v775 = vld [vmem:[#allocation5 + $0x138] sm:$0xff]
        %v776 = vld [vmem:[#allocation5 + $0x140] sm:$0xff]
        %v777 = vld [vmem:[#allocation5 + $0x148] sm:$0xff]
        %v778 = vld [vmem:[#allocation5 + $0x150] sm:$0xff]
        %v779 = vld [vmem:[#allocation5 + $0x158] sm:$0xff]
        %v780 = vld [vmem:[#allocation5 + $0x160] sm:$0xff]
        %v781 = vld [vmem:[#allocation5 + $0x168] sm:$0xff]
        %v782 = vld [vmem:[#allocation5 + $0x170] sm:$0xff]
        %v783 = vld [vmem:[#allocation5 + $0x178] sm:$0xff]
        %v784 = vld [vmem:[#allocation5 + $0x180] sm:$0xff]
        %v785 = vld [vmem:[#allocation5 + $0x188] sm:$0xff]
        %v786 = vld [vmem:[#allocation5 + $0x190] sm:$0xff]
        %v787 = vld [vmem:[#allocation5 + $0x198] sm:$0xff]
        %v788 = vld [vmem:[#allocation5 + $0x1a0] sm:$0xff]
        %v789 = vld [vmem:[#allocation5 + $0x1a8] sm:$0xff]
        %v790 = vld [vmem:[#allocation5 + $0x1b0] sm:$0xff]
        %v791 = vld [vmem:[#allocation5 + $0x1b8] sm:$0xff]
        %v792 = vld [vmem:[#allocation5 + $0x1c0] sm:$0xff]
        %v793 = vld [vmem:[#allocation5 + $0x1c8] sm:$0xff]
        %v794 = vld [vmem:[#allocation5 + $0x1d0] sm:$0xff]
        %v795 = vld [vmem:[#allocation5 + $0x1d8] sm:$0xff]
        %v796 = vld [vmem:[#allocation5 + $0x1e0] sm:$0xff]
        %v797 = vld [vmem:[#allocation5 + $0x1e8] sm:$0xff]
        %v798 = vld [vmem:[#allocation5 + $0x1f0] sm:$0xff]
        %v799 = vld [vmem:[#allocation5 + $0x1f8] sm:$0xff]
        %v800 = vld [vmem:[%s2] sm:$0x1]
        %v802 = vlaneseq
        %v803 = vshrl.u32 %v802, 7
        %v804 = vsub.s32 0, %v803
        %v805 = vrot.slane %v800, %v804
        %807 = vmatprep.subr.mxu0 0.0
        %808 = vmatpush1.msra.mxu0 %v736
        %809 = vmatprep.subr.mxu0 0.0
        %810 = vmatpush1.msra.mxu0 %v737
        %811 = vmatprep.subr.mxu0 0.0
        %812 = vmatpush1.msra.mxu0 %v738
        %813 = vmatprep.subr.mxu0 0.0
        %814 = vmatpush1.msra.mxu0 %v739
        %815 = vmatprep.subr.mxu0 0.0
        %816 = vmatpush1.msra.mxu0 %v740
        %817 = vmatprep.subr.mxu0 0.0
        %818 = vmatpush1.msra.mxu0 %v741
        %819 = vmatprep.subr.mxu0 0.0
        %820 = vmatpush1.msra.mxu0 %v742
        %821 = vmatprep.subr.mxu0 0.0
        %822 = vmatpush1.msra.mxu0 %v743
        %823 = vmatprep.subr.mxu0 0.0
        %824 = vmatpush1.msra.mxu0 %v744
        %825 = vmatprep.subr.mxu0 0.0
        %826 = vmatpush1.msra.mxu0 %v745
        %827 = vmatprep.subr.mxu0 0.0
        %828 = vmatpush1.msra.mxu0 %v746
        %829 = vmatprep.subr.mxu0 0.0
        %830 = vmatpush1.msra.mxu0 %v747
        %831 = vmatprep.subr.mxu0 0.0
        %832 = vmatpush1.msra.mxu0 %v748
        %833 = vmatprep.subr.mxu0 0.0
        %834 = vmatpush1.msra.mxu0 %v749
        %835 = vmatprep.subr.mxu0 0.0
        %836 = vmatpush1.msra.mxu0 %v750
        %837 = vmatprep.subr.mxu0 0.0
        %838 = vmatpush1.msra.mxu0 %v751
        %839 = vmatprep.subr.mxu0 0.0
        %840 = vmatpush1.msra.mxu0 %v752
        %841 = vmatprep.subr.mxu0 0.0
        %842 = vmatpush1.msra.mxu0 %v753
        %843 = vmatprep.subr.mxu0 0.0
        %844 = vmatpush1.msra.mxu0 %v754
        %845 = vmatprep.subr.mxu0 0.0
        %846 = vmatpush1.msra.mxu0 %v755
        %847 = vmatprep.subr.mxu0 0.0
        %848 = vmatpush1.msra.mxu0 %v756
        %849 = vmatprep.subr.mxu0 0.0
        %850 = vmatpush1.msra.mxu0 %v757
        %851 = vmatprep.subr.mxu0 0.0
        %852 = vmatpush1.msra.mxu0 %v758
        %853 = vmatprep.subr.mxu0 0.0
        %854 = vmatpush1.msra.mxu0 %v759
        %855 = vmatprep.subr.mxu0 0.0
        %856 = vmatpush1.msra.mxu0 %v760
        %857 = vmatprep.subr.mxu0 0.0
        %858 = vmatpush1.msra.mxu0 %v761
        %859 = vmatprep.subr.mxu0 0.0
        %860 = vmatpush1.msra.mxu0 %v762
        %861 = vmatprep.subr.mxu0 0.0
        %862 = vmatpush1.msra.mxu0 %v763
        %863 = vmatprep.subr.mxu0 0.0
        %864 = vmatpush1.msra.mxu0 %v764
        %865 = vmatprep.subr.mxu0 0.0
        %866 = vmatpush1.msra.mxu0 %v765
        %867 = vmatprep.subr.mxu0 0.0
        %868 = vmatpush1.msra.mxu0 %v766
        %869 = vmatprep.subr.mxu0 0.0
        %870 = vmatpush1.msra.mxu0 %v767
        %871 = vmatprep.mubr.f32.mxu0 %v733
        %872 = vmatmul.mubr.f32.gmra.mrb[0].mxu0 %v732
        %v873 = vpop.f32.mrb[0].mxu0
        %v874 = vadd.f32 %v805, %v873
        %v875 = vpop.f32.mrb[0].mxu0
        %876 = vdwg.mxu0
        %877 = vmatprep.subr.mxu0 0.0
        %878 = vmatpush1.msra.mxu0 %v768
        %879 = vmatprep.subr.mxu0 0.0
        %880 = vmatpush1.msra.mxu0 %v769
        %881 = vmatprep.subr.mxu0 0.0
        %882 = vmatpush1.msra.mxu0 %v770
        %883 = vmatprep.subr.mxu0 0.0
        %884 = vmatpush1.msra.mxu0 %v771
        %885 = vmatprep.subr.mxu0 0.0
        %886 = vmatpush1.msra.mxu0 %v772
        %887 = vmatprep.subr.mxu0 0.0
        %888 = vmatpush1.msra.mxu0 %v773
        %889 = vmatprep.subr.mxu0 0.0
        %890 = vmatpush1.msra.mxu0 %v774
        %891 = vmatprep.subr.mxu0 0.0
        %892 = vmatpush1.msra.mxu0 %v775
        %893 = vmatprep.subr.mxu0 0.0
        %894 = vmatpush1.msra.mxu0 %v776
        %895 = vmatprep.subr.mxu0 0.0
        %896 = vmatpush1.msra.mxu0 %v777
        %897 = vmatprep.subr.mxu0 0.0
        %898 = vmatpush1.msra.mxu0 %v778
        %899 = vmatprep.subr.mxu0 0.0
        %900 = vmatpush1.msra.mxu0 %v779
        %901 = vmatprep.subr.mxu0 0.0
        %902 = vmatpush1.msra.mxu0 %v780
        %903 = vmatprep.subr.mxu0 0.0
        %904 = vmatpush1.msra.mxu0 %v781
        %905 = vmatprep.subr.mxu0 0.0
        %906 = vmatpush1.msra.mxu0 %v782
        %907 = vmatprep.subr.mxu0 0.0
        %908 = vmatpush1.msra.mxu0 %v783
        %909 = vmatprep.subr.mxu0 0.0
        %910 = vmatpush1.msra.mxu0 %v784
        %911 = vmatprep.subr.mxu0 0.0
        %912 = vmatpush1.msra.mxu0 %v785
        %913 = vmatprep.subr.mxu0 0.0
        %914 = vmatpush1.msra.mxu0 %v786
        %915 = vmatprep.subr.mxu0 0.0
        %916 = vmatpush1.msra.mxu0 %v787
        %917 = vmatprep.subr.mxu0 0.0
        %918 = vmatpush1.msra.mxu0 %v788
        %919 = vmatprep.subr.mxu0 0.0
        %920 = vmatpush1.msra.mxu0 %v789
        %921 = vmatprep.subr.mxu0 0.0
        %922 = vmatpush1.msra.mxu0 %v790
        %923 = vmatprep.subr.mxu0 0.0
        %924 = vmatpush1.msra.mxu0 %v791
        %925 = vmatprep.subr.mxu0 0.0
        %926 = vmatpush1.msra.mxu0 %v792
        %927 = vmatprep.subr.mxu0 0.0
        %928 = vmatpush1.msra.mxu0 %v793
        %929 = vmatprep.subr.mxu0 0.0
        %930 = vmatpush1.msra.mxu0 %v794
        %931 = vmatprep.subr.mxu0 0.0
        %932 = vmatpush1.msra.mxu0 %v795
        %933 = vmatprep.subr.mxu0 0.0
        %934 = vmatpush1.msra.mxu0 %v796
        %935 = vmatprep.subr.mxu0 0.0
        %936 = vmatpush1.msra.mxu0 %v797
        %937 = vmatprep.subr.mxu0 0.0
        %938 = vmatpush1.msra.mxu0 %v798
        %939 = vmatprep.subr.mxu0 0.0
        %940 = vmatpush1.msra.mxu0 %v799
        %941 = vmatprep.mubr.f32.mxu0 %v735
        %942 = vmatmul.mubr.f32.gmra.mrb[0].mxu0 %v734
        %v943 = vpop.f32.mrb[0].mxu0
        %v944 = vadd.f32 %v874, %v943
        %v945 = vpop.f32.mrb[0].mxu0
        %946 = vdwg.mxu0
        %v947 = vld [vmem:[%s292] sm:$0xff]
        %v948 = vlaneseq
        %v949 = vand.u32 %v948, 127
        %v950 = vlaneseq
        %v951 = vshrl.u32 %v950, 7
        %s952 = smul.u32 %s21, 8
        %v953 = vstv %s952
        %v954 = vadd.s32 %v953, %v951
        %vm955 = vcmp.lt.s32.totalorder %v954, 12
        %956 = vmax.xlane.f32.xlu0 %v944
        %v957 = vpop.xlane.xlu0 %956
        %v958 = vsub.f32 %v944, %v957
        %v959 = vmul.f32 %v958, 1.442695
        %v960 = vpow.pop %v959
        %961 = vadd.xlane.f32.xlu0 %v960
        %v962 = vpop.xlane.xlu0 %961
        %v963 = vlog2.pop %v962
        %v964 = vmul.f32 %v963, 0.6931472
        %965 = vset.pattern.permute.xlu0 0
        %966 = vperm.xlu0 %965, %v947
        %v967 = vpop.permute.xlu0 %966
        %vm968 = vcmp.eq.s32.totalorder %v949, %v967
        %v969 = vsel %vm968, 1, 0
        %v970 = vcvt.s32.f32 %v969
        %v971 = vmul.f32 %v970, %v944
        %972 = vadd.xlane.f32.xlu0 %v971
        %v973 = vpop.xlane.xlu0 %972
        %v974 = vadd.f32 %v957, %v964
        %v975 = vsub.f32 %v974, %v973
        %v976 = vsel %vm955, %v975, 0.0
        %vm977 = vcmask 7168
        %v978 = vsel %vm977, %v976, 0.0
        %979 = vadd.xlane.f32.xlu0 %v978
        %v980 = vpop.xlane.xlu0 %979
        %v981 = vrot.slane %v980, 4
        %v982 = vadd.f32 %v980, %v981
        %v983 = vrot.slane %v982, 2
        %v984 = vadd.f32 %v982, %v983
        %v985 = vrot.slane %v984, 1
        %v986 = vadd.f32 %v984, %v985
        %s987 = vtos %v986
        %v988 = vstv %s987
        %vm989 = vcmask 0
        %990 = vst.msk [vmem:[%s295] sm:$0x1] %vm989, %v988
        %vm991 = vcmp.eq.f32.partialorder %v944, %v957
        %v992 = vsel %vm991, %v949, 128
        %v993 = vand.u32 %v992, 65535
        %v994 = vshra.s32 %v992, 16
        %v995 = vcvt.s32.f32 %v993
        %v996 = vcvt.s32.f32 %v994
        %997 = vmin.xlane.f32.xlu0 %v996
        %v998 = vpop.xlane.xlu0 %997
        %vm999 = vcmp.eq.f32.partialorder %v996, %v998
        %v1000 = vsel %vm999, %v995, inf
        %1001 = vmin.xlane.f32.xlu0 %v1000
        %v1002 = vpop.xlane.xlu0 %1001
        %v1003 = vcvt.f32.s32 %v1002
        %v1004 = vcvt.f32.s32 %v998
        %v1005 = vshll.u32 %v1004, 16
        %v1006 = vadd.s32 %v1005, %v1003
        %vm1007 = vcmp.eq.s32.totalorder %v1006, %v947
        %vm1008 = vmand %vm955, %vm1007
        %v1009 = vsel %vm1008, 1, 0
        %v1010 = vsel %vm977, %v1009, 0
        %v1011 = vand.u32 %v1010, 65535
        %v1012 = vshrl.u32 %v1010, 16
        %v1013 = vcvt.s32.f32 %v1011
        %v1014 = vcvt.s32.f32 %v1012
        %1015 = vadd.xlane.f32.xlu0 %v1013
        %v1016 = vpop.xlane.xlu0 %1015
        %1017 = vadd.xlane.f32.xlu0 %v1014
        %v1018 = vpop.xlane.xlu0 %1017
        %v1019 = vcvt.f32.s32 %v1016
        %v1020 = vcvt.f32.s32 %v1018
        %v1021 = vshll.u32 %v1020, 16
        %v1022 = vadd.s32 %v1021, %v1019
        %v1023 = vrot.slane %v1022, 4
        %v1024 = vadd.s32 %v1022, %v1023
        %v1025 = vrot.slane %v1024, 2
        %v1026 = vadd.s32 %v1024, %v1025
        %v1027 = vrot.slane %v1026, 1
        %v1028 = vadd.s32 %v1026, %v1027
        %s1029 = vtos %v1028
        %v1030 = vstv %s1029
        %1031 = vst.msk [vmem:[%s298] sm:$0x1] %vm989, %v1030
        %p1032 = scmp.lt.s32.totalorder %s21, 1
        %s1033 = scalar_select %p1032, %s21, 1
        %s1034 = scalar_lea.vmem %s4, %s1033
        %p1035 = scmp.lt.s32.totalorder %s21, 1
        %s1036 = scalar_select %p1035, %s21, 1
        %s1037 = scalar_lea.vmem %s5, %s1036
        // Predicated region
        $region45: #{tpu_custom_call.1} parent=35 // pred_check
          %p1038 = pneg %p133
        $region46: #{tpu_custom_call.1} parent=35 // pred_check_branch
          %1040 = sbr.rel (%p1038) target = $region48
        $region47: #{tpu_custom_call.1} parent=35 // pred_region
          _
        $region48: #{tpu_custom_call.1} parent=35 // pred_fallthru
          _
        // Predicated region
        $region49: #{tpu_custom_call.1} parent=35 // pred_check
          %p1041 = pneg %p159
        $region50: #{tpu_custom_call.1} parent=35 // pred_check_branch
          %1043 = sbr.rel (%p1041) target = $region52
        $region51: #{tpu_custom_call.1} parent=35 // pred_region
          _
        $region52: #{tpu_custom_call.1} parent=35 // pred_fallthru
          _
      $region36: #{tpu_custom_call.1} parent=5 // pred_fallthru
        _
      %p1044 = scmp.le.s32.totalorder 2, %s16
      // Predicated region
      $region53: #{tpu_custom_call.1} parent=5 // pred_check
        %p1045 = pneg %p1044
      $region54: #{tpu_custom_call.1} parent=5 // pred_check_branch
        %1047 = sbr.rel (%p1045) target = $region56
      $region55: #{tpu_custom_call.1} parent=5 // pred_region
        %s1048 = ssub.s32 %s16, 2
        // Predicated region
        $region57: #{tpu_custom_call.1} parent=55 // pred_check
          %p1049 = pneg %p139
        $region58: #{tpu_custom_call.1} parent=55 // pred_check_branch
          %1051 = sbr.rel (%p1049) target = $region60
        $region59: #{tpu_custom_call.1} parent=55 // pred_region
          %p1052 = scmp.lt.s32.totalorder %s22, 1
          %s1053 = scalar_select %p1052, %s22, 1
          %s1054 = scalar_lea.vmem %s4, %s1053
        $region60: #{tpu_custom_call.1} parent=55 // pred_fallthru
          _
        // Predicated region
        $region61: #{tpu_custom_call.1} parent=55 // pred_check
          %p1055 = pneg %p165
        $region62: #{tpu_custom_call.1} parent=55 // pred_check_branch
          %1057 = sbr.rel (%p1055) target = $region64
        $region63: #{tpu_custom_call.1} parent=55 // pred_region
          %p1058 = scmp.lt.s32.totalorder %s22, 1
          %s1059 = scalar_select %p1058, %s22, 1
          %s1060 = scalar_lea.vmem %s5, %s1059
        $region64: #{tpu_custom_call.1} parent=55 // pred_fallthru
          _
      $region56: #{tpu_custom_call.1} parent=5 // pred_fallthru
        _
    $region6: #{tpu_custom_call.1} parent=1 // loop_footer
      %s20 = sadd.s32 1, %s16
    $region7: #{tpu_custom_call.1} parent=1 // loop_footer_branch
      %15 = sbr.rel target = $region3
    $region8: #{tpu_custom_call.1} parent=1 // loop_exit
      _
    %1061 = vsyncpa [#allocation4], 1
    %s1062 = scalar_lea.sflag [#allocation4], 1
    %1063 = vsyncpa %s1062, 1
    %1064 = vsyncpa [#allocation6], 1

</llo_original>
